<compile_context>
chip_gen: v5e
topology: v5e:2x2
jax: 0.10.0
libtpu: 0.0.40
codegen_flags: <defaults>
</compile_context>

<pallas_src>
import jax
import jax.numpy as jnp
import numpy as np
from jax import lax
from jax.experimental import pallas as pl
from jax.experimental.pallas import tpu as pltpu  # noqa: F401  (imported for parity)

# ----- module hyper-parameters (deterministic, in-script) -------------------
N_FEATURES = 32
N_LINEARS = 2
SCALING_FACTOR = 0.5
USE_BN = True
BN_EPS = 1e-5
BATCH = 256  # lane-aligned (multiple of 128); whole batch resident in one block


def residual_block_kernel(xt_ref, w_ref, b_ref, gamma_ref, beta_ref, ot_ref):
    """Transposed-layout residual block: activations live as (F, B).

    xt_ref:    (F, B)      input activations, feature-major (batch on lanes)
    w_ref:     (L, F, F)   PyTorch Linear weights (out, in) — used directly: W @ h
    b_ref:     (L, F, 1)   linear biases
    gamma_ref: (L, F, 1)   BN scale
    beta_ref:  (L, F, 1)   BN shift
    ot_ref:    (F, B)      output (lane-dense stores: last dim is the batch)
    """
    x = xt_ref[...].astype(jnp.float32)          # (F, B)
    inv_b = jnp.float32(1.0 / x.shape[1])

    # Hoist all per-layer parameter loads out of the unrolled layer loop.
    w_all = w_ref[...].astype(jnp.float32)       # (L, F, F)
    b_all = b_ref[...].astype(jnp.float32)       # (L, F, 1)
    g_all = gamma_ref[...].astype(jnp.float32)   # (L, F, 1)
    be_all = beta_ref[...].astype(jnp.float32)   # (L, F, 1)

    h = x
    # N_LINEARS is a small static constant -> unrolled at trace time.
    for i in range(N_LINEARS):
        # Linear: y = x @ W^T + b   <=>   y^T = W @ x^T + b   (MXU N-dim = batch)
        h = jnp.dot(w_all[i], h, preferred_element_type=jnp.float32) + b_all[i]
        if USE_BN:
            # Single-pass training-mode batch statistics over the batch (lane) axis.
            s1 = jnp.sum(h, axis=1, keepdims=True)         # (F, 1)  XLU reduce
            s2 = jnp.sum(h * h, axis=1, keepdims=True)     # (F, 1)
            mean = s1 * inv_b
            var = s2 * inv_b - mean * mean                 # biased variance
            inv_std = lax.rsqrt(var + BN_EPS)              # EUP slot (cheap)
            # Fold normalization + affine into one per-feature scale/shift.
            scale = g_all[i] * inv_std                     # (F, 1)
            shift = be_all[i] - mean * scale               # (F, 1)
            h = h * scale + shift
        # activation = ReLU
        h = jnp.maximum(h, 0.0)
    ot_ref[...] = (x + SCALING_FACTOR * h).astype(ot_ref.dtype)


def residual_block(x, w, b, gamma, beta):
    """x: (B, F) natural layout. Transposed to (F, B) at the XLA level so the
    batch maps to the lane axis inside the kernel; transposed back on output."""
    B, F = x.shape
    L = w.shape[0]
    xt = jnp.transpose(x)  # (F, B) — layout plumbing only
    ot = pl.pallas_call(
        residual_block_kernel,
        out_shape=jax.ShapeDtypeStruct((F, B), x.dtype),
        in_specs=[
            pl.BlockSpec((F, B), lambda: (0, 0)),
            pl.BlockSpec((L, F, F), lambda: (0, 0, 0)),
            pl.BlockSpec((L, F, 1), lambda: (0, 0, 0)),
            pl.BlockSpec((L, F, 1), lambda: (0, 0, 0)),
            pl.BlockSpec((L, F, 1), lambda: (0, 0, 0)),
        ],
        out_specs=pl.BlockSpec((F, B), lambda: (0, 0)),
    )(xt, w, b, gamma, beta)
    return jnp.transpose(ot)  # back to (B, F)


def reference(x, w, b, gamma, beta):
    """Pure-JAX reference mirroring the PyTorch semantics (natural (B, F) layout)."""
    h = x.astype(jnp.float32)
    x32 = h
    for i in range(N_LINEARS):
        h = h @ w[i].T + b[i, :, 0]
        if USE_BN:
            mean = jnp.mean(h, axis=0, keepdims=True)
            var = jnp.mean((h - mean) ** 2, axis=0, keepdims=True)
            h = (h - mean) / jnp.sqrt(var + BN_EPS)
            h = h * gamma[i, :, 0] + beta[i, :, 0]
        h = jnp.maximum(h, 0.0)
    return (x32 + SCALING_FACTOR * h).astype(x.dtype)


if __name__ == "__main__":
    key = jax.random.PRNGKey(0)
    k_x, k_w, k_b, k_g, k_be = jax.random.split(key, 5)

    x = jax.random.normal(k_x, (BATCH, N_FEATURES), dtype=jnp.float32)

    # Deterministic synthetic parameters. PyTorch nn.Linear weight is
    # (out_features, in_features); with the transposed activation layout the
    # kernel uses W directly (y^T = W @ x^T + b), so no pre-transpose needed.
    bound = 1.0 / np.sqrt(N_FEATURES)
    w = jax.random.uniform(
        k_w, (N_LINEARS, N_FEATURES, N_FEATURES), jnp.float32, -bound, bound
    )
    b = jax.random.uniform(
        k_b, (N_LINEARS, N_FEATURES, 1), jnp.float32, -bound, bound
    )
    # BN affine params: PyTorch defaults (gamma=1, beta=0) perturbed
    # deterministically so they actually exercise the math.
    gamma = 1.0 + 0.1 * jax.random.normal(k_g, (N_LINEARS, N_FEATURES, 1), jnp.float32)
    beta = 0.1 * jax.random.normal(k_be, (N_LINEARS, N_FEATURES, 1), jnp.float32)

    out = residual_block(x, w, b, gamma, beta)
    out = jax.block_until_ready(out)

    ref = jax.block_until_ready(reference(x, w, b, gamma, beta))
    np.testing.assert_allclose(np.asarray(out), np.asarray(ref), rtol=2e-5, atol=2e-5)

    print("KERNEL_OK")
</pallas_src>

<mosaic_0001>
module attributes {stable_mosaic.version = 11 : i64} {
  func.func @residual_block_kernel(%arg0: memref<32x256xf32, #tpu.memory_space<vmem>>, %arg1: memref<2x32x32xf32, #tpu.memory_space<vmem>>, %arg2: memref<2x32x1xf32, #tpu.memory_space<vmem>>, %arg3: memref<2x32x1xf32, #tpu.memory_space<vmem>>, %arg4: memref<2x32x1xf32, #tpu.memory_space<vmem>>, %arg5: memref<32x256xf32, #tpu.memory_space<vmem>>) attributes {dimension_semantics = [], scalar_prefetch = 0 : i64, scratch_operands = 0 : i64, tpu.core_type = #tpu.core_type<tc>} {
    %c0 = arith.constant 0 : index
    %c0_0 = arith.constant 0 : index
    %0 = vector.load %arg0[%c0, %c0_0] : memref<32x256xf32, #tpu.memory_space<vmem>>, vector<32x256xf32>
    %c0_1 = arith.constant 0 : index
    %c0_2 = arith.constant 0 : index
    %c0_3 = arith.constant 0 : index
    %1 = vector.load %arg1[%c0_1, %c0_2, %c0_3] : memref<2x32x32xf32, #tpu.memory_space<vmem>>, vector<2x32x32xf32>
    %c0_4 = arith.constant 0 : index
    %c0_5 = arith.constant 0 : index
    %c0_6 = arith.constant 0 : index
    %2 = vector.load %arg2[%c0_4, %c0_5, %c0_6] : memref<2x32x1xf32, #tpu.memory_space<vmem>>, vector<2x32x1xf32>
    %c0_7 = arith.constant 0 : index
    %c0_8 = arith.constant 0 : index
    %c0_9 = arith.constant 0 : index
    %3 = vector.load %arg3[%c0_7, %c0_8, %c0_9] : memref<2x32x1xf32, #tpu.memory_space<vmem>>, vector<2x32x1xf32>
    %c0_10 = arith.constant 0 : index
    %c0_11 = arith.constant 0 : index
    %c0_12 = arith.constant 0 : index
    %4 = vector.load %arg4[%c0_10, %c0_11, %c0_12] : memref<2x32x1xf32, #tpu.memory_space<vmem>>, vector<2x32x1xf32>
    %5 = vector.extract_strided_slice %1 {offsets = [0, 0, 0], sizes = [1, 32, 32], strides = [1, 1, 1]} : vector<2x32x32xf32> to vector<1x32x32xf32>
    %6 = vector.shape_cast %5 : vector<1x32x32xf32> to vector<32x32xf32>
    %cst = arith.constant dense<0.000000e+00> : vector<32x256xf32>
    %7 = tpu.matmul %6, %0, %cst {dimension_numbers = #tpu.dot_dimension_numbers<[1], [0], [0], [1], [0, 0, 1, 1], [], []>} : vector<32x32xf32>, vector<32x256xf32>, vector<32x256xf32> -> vector<32x256xf32>
    %8 = vector.extract_strided_slice %2 {offsets = [0, 0, 0], sizes = [1, 32, 1], strides = [1, 1, 1]} : vector<2x32x1xf32> to vector<1x32x1xf32>
    %9 = vector.shape_cast %8 : vector<1x32x1xf32> to vector<32x1xf32>
    %10 = vector.broadcast %9 : vector<32x1xf32> to vector<32x256xf32>
    %11 = arith.addf %7, %10 : vector<32x256xf32>
    %cst_13 = arith.constant dense<0.000000e+00> : vector<32xf32>
    %12 = vector.multi_reduction <add>, %11, %cst_13 [1] : vector<32x256xf32> to vector<32xf32>
    %13 = vector.shape_cast %12 : vector<32xf32> to vector<32x1xf32>
    %14 = arith.mulf %11, %11 : vector<32x256xf32>
    %cst_14 = arith.constant dense<0.000000e+00> : vector<32xf32>
    %15 = vector.multi_reduction <add>, %14, %cst_14 [1] : vector<32x256xf32> to vector<32xf32>
    %16 = vector.shape_cast %15 : vector<32xf32> to vector<32x1xf32>
    %cst_15 = arith.constant 3.906250e-03 : f32
    %17 = vector.broadcast %cst_15 : f32 to vector<32x1xf32>
    %18 = arith.mulf %13, %17 : vector<32x1xf32>
    %cst_16 = arith.constant 3.906250e-03 : f32
    %19 = vector.broadcast %cst_16 : f32 to vector<32x1xf32>
    %20 = arith.mulf %16, %19 : vector<32x1xf32>
    %21 = arith.mulf %18, %18 : vector<32x1xf32>
    %22 = arith.subf %20, %21 : vector<32x1xf32>
    %cst_17 = arith.constant 9.99999974E-6 : f32
    %23 = vector.broadcast %cst_17 : f32 to vector<32x1xf32>
    %24 = arith.addf %22, %23 : vector<32x1xf32>
    %25 = math.rsqrt %24 : vector<32x1xf32>
    %26 = vector.extract_strided_slice %3 {offsets = [0, 0, 0], sizes = [1, 32, 1], strides = [1, 1, 1]} : vector<2x32x1xf32> to vector<1x32x1xf32>
    %27 = vector.shape_cast %26 : vector<1x32x1xf32> to vector<32x1xf32>
    %28 = arith.mulf %27, %25 : vector<32x1xf32>
    %29 = vector.extract_strided_slice %4 {offsets = [0, 0, 0], sizes = [1, 32, 1], strides = [1, 1, 1]} : vector<2x32x1xf32> to vector<1x32x1xf32>
    %30 = vector.shape_cast %29 : vector<1x32x1xf32> to vector<32x1xf32>
    %31 = arith.mulf %18, %28 : vector<32x1xf32>
    %32 = arith.subf %30, %31 : vector<32x1xf32>
    %33 = vector.broadcast %28 : vector<32x1xf32> to vector<32x256xf32>
    %34 = arith.mulf %11, %33 : vector<32x256xf32>
    %35 = vector.broadcast %32 : vector<32x1xf32> to vector<32x256xf32>
    %36 = arith.addf %34, %35 : vector<32x256xf32>
    %cst_18 = arith.constant 0.000000e+00 : f32
    %37 = vector.broadcast %cst_18 : f32 to vector<32x256xf32>
    %38 = arith.maximumf %36, %37 : vector<32x256xf32>
    %39 = vector.extract_strided_slice %1 {offsets = [1, 0, 0], sizes = [1, 32, 32], strides = [1, 1, 1]} : vector<2x32x32xf32> to vector<1x32x32xf32>
    %40 = vector.shape_cast %39 : vector<1x32x32xf32> to vector<32x32xf32>
    %cst_19 = arith.constant dense<0.000000e+00> : vector<32x256xf32>
    %41 = tpu.matmul %40, %38, %cst_19 {dimension_numbers = #tpu.dot_dimension_numbers<[1], [0], [0], [1], [0, 0, 1, 1], [], []>} : vector<32x32xf32>, vector<32x256xf32>, vector<32x256xf32> -> vector<32x256xf32>
    %42 = vector.extract_strided_slice %2 {offsets = [1, 0, 0], sizes = [1, 32, 1], strides = [1, 1, 1]} : vector<2x32x1xf32> to vector<1x32x1xf32>
    %43 = vector.shape_cast %42 : vector<1x32x1xf32> to vector<32x1xf32>
    %44 = vector.broadcast %43 : vector<32x1xf32> to vector<32x256xf32>
    %45 = arith.addf %41, %44 : vector<32x256xf32>
    %cst_20 = arith.constant dense<0.000000e+00> : vector<32xf32>
    %46 = vector.multi_reduction <add>, %45, %cst_20 [1] : vector<32x256xf32> to vector<32xf32>
    %47 = vector.shape_cast %46 : vector<32xf32> to vector<32x1xf32>
    %48 = arith.mulf %45, %45 : vector<32x256xf32>
    %cst_21 = arith.constant dense<0.000000e+00> : vector<32xf32>
    %49 = vector.multi_reduction <add>, %48, %cst_21 [1] : vector<32x256xf32> to vector<32xf32>
    %50 = vector.shape_cast %49 : vector<32xf32> to vector<32x1xf32>
    %cst_22 = arith.constant 3.906250e-03 : f32
    %51 = vector.broadcast %cst_22 : f32 to vector<32x1xf32>
    %52 = arith.mulf %47, %51 : vector<32x1xf32>
    %cst_23 = arith.constant 3.906250e-03 : f32
    %53 = vector.broadcast %cst_23 : f32 to vector<32x1xf32>
    %54 = arith.mulf %50, %53 : vector<32x1xf32>
    %55 = arith.mulf %52, %52 : vector<32x1xf32>
    %56 = arith.subf %54, %55 : vector<32x1xf32>
    %cst_24 = arith.constant 9.99999974E-6 : f32
    %57 = vector.broadcast %cst_24 : f32 to vector<32x1xf32>
    %58 = arith.addf %56, %57 : vector<32x1xf32>
    %59 = math.rsqrt %58 : vector<32x1xf32>
    %60 = vector.extract_strided_slice %3 {offsets = [1, 0, 0], sizes = [1, 32, 1], strides = [1, 1, 1]} : vector<2x32x1xf32> to vector<1x32x1xf32>
    %61 = vector.shape_cast %60 : vector<1x32x1xf32> to vector<32x1xf32>
    %62 = arith.mulf %61, %59 : vector<32x1xf32>
    %63 = vector.extract_strided_slice %4 {offsets = [1, 0, 0], sizes = [1, 32, 1], strides = [1, 1, 1]} : vector<2x32x1xf32> to vector<1x32x1xf32>
    %64 = vector.shape_cast %63 : vector<1x32x1xf32> to vector<32x1xf32>
    %65 = arith.mulf %52, %62 : vector<32x1xf32>
    %66 = arith.subf %64, %65 : vector<32x1xf32>
    %67 = vector.broadcast %62 : vector<32x1xf32> to vector<32x256xf32>
    %68 = arith.mulf %45, %67 : vector<32x256xf32>
    %69 = vector.broadcast %66 : vector<32x1xf32> to vector<32x256xf32>
    %70 = arith.addf %68, %69 : vector<32x256xf32>
    %cst_25 = arith.constant 0.000000e+00 : f32
    %71 = vector.broadcast %cst_25 : f32 to vector<32x256xf32>
    %72 = arith.maximumf %70, %71 : vector<32x256xf32>
    %cst_26 = arith.constant 5.000000e-01 : f32
    %73 = vector.broadcast %cst_26 : f32 to vector<32x256xf32>
    %74 = arith.mulf %73, %72 : vector<32x256xf32>
    %75 = arith.addf %0, %74 : vector<32x256xf32>
    %c0_27 = arith.constant 0 : index
    %c0_28 = arith.constant 0 : index
    %76 = vector.load %arg5[%c0_27, %c0_28] : memref<32x256xf32, #tpu.memory_space<vmem>>, vector<32x256xf32>
    tpu.vector_store %arg5[%c0_27, %c0_28], %75 {strides = array<i32>} : memref<32x256xf32, #tpu.memory_space<vmem>>, vector<32x256xf32>,
    return
  }
}

</mosaic_0001>

<llo_original>
// kernel: tpu_custom_call.1
$region0: #{tpu_custom_call.1}
  #allocation0 [shape = 'u32[]', space=smem, size = 0x4, offset = 0x4, fixed_abs, tag = 'smem constant byte address 0x4 - core index']
  #allocation1 [shape = 'u32[72,128]{1,0:T(1,128)}', space=vmem, size = 0x9000, scoped, tag = 'internal scratch']
  %s0 = inlined_call_operand.vmem [shape: f32[32,256], index: 0, kind: input, shape index: {}]
  %s1 = inlined_call_operand.vmem [shape: f32[2,32,32], index: 1, kind: input, shape index: {}]
  %s2 = inlined_call_operand.vmem [shape: f32[2,32,1], index: 2, kind: input, shape index: {}]
  %s3 = inlined_call_operand.vmem [shape: f32[2,32,1], index: 3, kind: input, shape index: {}]
  %s4 = inlined_call_operand.vmem [shape: f32[2,32,1], index: 4, kind: input, shape index: {}]
  %s5 = inlined_call_operand.hbm [shape: f32[32,256], index: 5, kind: output, shape index: {}]
  %s6 = sld [smem:[#allocation0]]
  $region30: #{tpu_custom_call.1} parent=0
    _
  %s8 = ssub.s32 1, %s6
  %s9 = scalar_select 0, %s8, %s6
  $region1: #{tpu_custom_call.1} parent=0
    #allocation2 [shape = 'u8[32768]{0}', space=vmem, size = 0x8000, scoped, tag = 'output window, operand 0, single buffered']
    #allocation3 [shape = 's32[1]{0}', space=sflag, size = 0x4, scoped, tag = 'scoped memory for tpu_custom_call.1']
    %10 = vsyncpa [#allocation3], 0
    // Predicated region
    $region2: #{tpu_custom_call.1} parent=1 // pred_check
      _
    $region3: #{tpu_custom_call.1} parent=1 // pred_check_branch
      %12 = sbr.rel (0) target = $region5
    $region4: #{tpu_custom_call.1} parent=1 // pred_region
      _
    $region5: #{tpu_custom_call.1} parent=1 // pred_fallthru
      _
    // Predicated region
    $region6: #{tpu_custom_call.1} parent=1 // pred_check
      _
    $region7: #{tpu_custom_call.1} parent=1 // pred_check_branch
      %14 = sbr.rel (0) target = $region9
    $region8: #{tpu_custom_call.1} parent=1 // pred_region
      _
    $region9: #{tpu_custom_call.1} parent=1 // pred_fallthru
      _
    // Predicated region
    $region10: #{tpu_custom_call.1} parent=1 // pred_check
      _
    $region11: #{tpu_custom_call.1} parent=1 // pred_check_branch
      %16 = sbr.rel (0) target = $region13
    $region12: #{tpu_custom_call.1} parent=1 // pred_region
      _
    $region13: #{tpu_custom_call.1} parent=1 // pred_fallthru
      _
    // Predicated region
    $region14: #{tpu_custom_call.1} parent=1 // pred_check
      _
    $region15: #{tpu_custom_call.1} parent=1 // pred_check_branch
      %18 = sbr.rel (0) target = $region17
    $region16: #{tpu_custom_call.1} parent=1 // pred_region
      _
    $region17: #{tpu_custom_call.1} parent=1 // pred_fallthru
      _
    // Predicated region
    $region18: #{tpu_custom_call.1} parent=1 // pred_check
      _
    $region19: #{tpu_custom_call.1} parent=1 // pred_check_branch
      %20 = sbr.rel (0) target = $region21
    $region20: #{tpu_custom_call.1} parent=1 // pred_region
      _
    $region21: #{tpu_custom_call.1} parent=1 // pred_fallthru
      _
    %v21 = vld [vmem:[%s0] sm:$0xff]
    %v22 = vld [vmem:[%s0 + $0x8] sm:$0xff]
    %v23 = vld [vmem:[%s0 + $0x10] sm:$0xff]
    %v24 = vld [vmem:[%s0 + $0x18] sm:$0xff]
    %v25 = vld [vmem:[%s0 + $0x20] sm:$0xff]
    %v26 = vld [vmem:[%s0 + $0x28] sm:$0xff]
    %v27 = vld [vmem:[%s0 + $0x30] sm:$0xff]
    %v28 = vld [vmem:[%s0 + $0x38] sm:$0xff]
    %v29 = vld [vmem:[%s1] sm:$0xff]
    %v30 = vld [vmem:[%s1 + $0x8] sm:$0xff]
    %v31 = vld [vmem:[%s1 + $0x10] sm:$0xff]
    %v32 = vld [vmem:[%s1 + $0x18] sm:$0xff]
    %v33 = vld [vmem:[%s1 + $0x20] sm:$0xff]
    %v34 = vld [vmem:[%s1 + $0x28] sm:$0xff]
    %v35 = vld [vmem:[%s1 + $0x30] sm:$0xff]
    %v36 = vld [vmem:[%s1 + $0x38] sm:$0xff]
    %v37 = vld [vmem:[%s2] sm:$0xff]
    %v38 = vld [vmem:[%s2 + $0x8] sm:$0xff]
    %v39 = vld [vmem:[%s2 + $0x10] sm:$0xff]
    %v40 = vld [vmem:[%s2 + $0x18] sm:$0xff]
    %v41 = vld [vmem:[%s2 + $0x20] sm:$0xff]
    %v42 = vld [vmem:[%s2 + $0x28] sm:$0xff]
    %v43 = vld [vmem:[%s2 + $0x30] sm:$0xff]
    %v44 = vld [vmem:[%s2 + $0x38] sm:$0xff]
    %v45 = vld [vmem:[%s3] sm:$0xff]
    %v46 = vld [vmem:[%s3 + $0x8] sm:$0xff]
    %v47 = vld [vmem:[%s3 + $0x10] sm:$0xff]
    %v48 = vld [vmem:[%s3 + $0x18] sm:$0xff]
    %v49 = vld [vmem:[%s3 + $0x20] sm:$0xff]
    %v50 = vld [vmem:[%s3 + $0x28] sm:$0xff]
    %v51 = vld [vmem:[%s3 + $0x30] sm:$0xff]
    %v52 = vld [vmem:[%s3 + $0x38] sm:$0xff]
    %v53 = vld [vmem:[%s4] sm:$0xff]
    %v54 = vld [vmem:[%s4 + $0x8] sm:$0xff]
    %v55 = vld [vmem:[%s4 + $0x10] sm:$0xff]
    %v56 = vld [vmem:[%s4 + $0x18] sm:$0xff]
    %v57 = vld [vmem:[%s4 + $0x20] sm:$0xff]
    %v58 = vld [vmem:[%s4 + $0x28] sm:$0xff]
    %v59 = vld [vmem:[%s4 + $0x30] sm:$0xff]
    %v60 = vld [vmem:[%s4 + $0x38] sm:$0xff]
    %62 = vset.pattern.permute.xlu0 0
    %63 = vperm.xlu0 %62, %v37
    %v64 = vpop.permute.xlu0 %63
    %67 = vset.pattern.permute.xlu0 0
    %68 = vperm.xlu0 %67, %v38
    %v69 = vpop.permute.xlu0 %68
    %72 = vset.pattern.permute.xlu0 0
    %73 = vperm.xlu0 %72, %v39
    %v74 = vpop.permute.xlu0 %73
    %77 = vset.pattern.permute.xlu0 0
    %78 = vperm.xlu0 %77, %v40
    %v79 = vpop.permute.xlu0 %78
    %vm81 = vcmask 261120
    %v83 = vsel %vm81, %v29, 0
    %v86 = vsel %vm81, %v30, 0
    %v89 = vsel %vm81, %v31, 0
    %v92 = vsel %vm81, %v32, 0
    %94 = vmatpush.msra.mxu0 0.0
    %95 = vmatpush.msra.mxu0 0.0
    %96 = vmatpush.msra.mxu0 0.0
    %97 = vmatpush.msra.mxu0 0.0
    %98 = vmatpush.msra.mxu0 0.0
    %99 = vmatpush.msra.mxu0 0.0
    %100 = vmatpush.msra.mxu0 0.0
    %101 = vmatpush.msra.mxu0 0.0
    %102 = vmatpush.msra.mxu0 0.0
    %103 = vmatpush.msra.mxu0 0.0
    %104 = vmatpush.msra.mxu0 0.0
    %105 = vmatpush.msra.mxu0 0.0
    %106 = vmatpush.msra.mxu0 %v27
    %107 = vmatpush.msra.mxu0 %v25
    %108 = vmatpush.msra.mxu0 %v23
    %109 = vmatpush.msra.mxu0 %v21
    %110 = vmatmul.f32.gmra.mxu0 %v83
    %v111 = vpop.f32.mrf.mxu0
    %v112 = vadd.f32 %v64, %v111
    %113 = vmatmul.f32.gmra.mxu0 %v86
    %v114 = vpop.f32.mrf.mxu0
    %v115 = vadd.f32 %v69, %v114
    %116 = vmatmul.f32.gmra.mxu0 %v89
    %v117 = vpop.f32.mrf.mxu0
    %v118 = vadd.f32 %v74, %v117
    %119 = vmatmul.f32.gmra.mxu0 %v92
    %v120 = vpop.f32.mrf.mxu0
    %v121 = vadd.f32 %v79, %v120
    %122 = vdwg.mxu0
    %123 = vmatpush.msra.mxu0 0.0
    %124 = vmatpush.msra.mxu0 0.0
    %125 = vmatpush.msra.mxu0 0.0
    %126 = vmatpush.msra.mxu0 0.0
    %127 = vmatpush.msra.mxu0 0.0
    %128 = vmatpush.msra.mxu0 0.0
    %129 = vmatpush.msra.mxu0 0.0
    %130 = vmatpush.msra.mxu0 0.0
    %131 = vmatpush.msra.mxu0 0.0
    %132 = vmatpush.msra.mxu0 0.0
    %133 = vmatpush.msra.mxu0 0.0
    %134 = vmatpush.msra.mxu0 0.0
    %135 = vmatpush.msra.mxu0 %v28
    %136 = vmatpush.msra.mxu0 %v26
    %137 = vmatpush.msra.mxu0 %v24
    %138 = vmatpush.msra.mxu0 %v22
    %139 = vmatmul.f32.gmra.mxu0 %v83
    %v140 = vpop.f32.mrf.mxu0
    %v141 = vadd.f32 %v64, %v140
    %142 = vmatmul.f32.gmra.mxu0 %v86
    %v143 = vpop.f32.mrf.mxu0
    %v144 = vadd.f32 %v69, %v143
    %145 = vmatmul.f32.gmra.mxu0 %v89
    %v146 = vpop.f32.mrf.mxu0
    %v147 = vadd.f32 %v74, %v146
    %148 = vmatmul.f32.gmra.mxu0 %v92
    %v149 = vpop.f32.mrf.mxu0
    %v150 = vadd.f32 %v79, %v149
    %151 = vdwg.mxu0
    %v152 = vadd.f32 %v112, %v141
    %153 = vadd.xlane.f32.xlu0 %v152
    %v154 = vpop.xlane.xlu0 %153
    %v155 = vadd.f32 %v115, %v144
    %156 = vadd.xlane.f32.xlu0 %v155
    %v157 = vpop.xlane.xlu0 %156
    %v158 = vadd.f32 %v118, %v147
    %159 = vadd.xlane.f32.xlu0 %v158
    %v160 = vpop.xlane.xlu0 %159
    %v161 = vadd.f32 %v121, %v150
    %162 = vadd.xlane.f32.xlu0 %v161
    %v163 = vpop.xlane.xlu0 %162
    %v164 = vmul.f32 %v112, %v112
    %v165 = vmul.f32 %v141, %v141
    %v166 = vmul.f32 %v115, %v115
    %v167 = vmul.f32 %v144, %v144
    %v168 = vmul.f32 %v118, %v118
    %v169 = vmul.f32 %v147, %v147
    %v170 = vmul.f32 %v121, %v121
    %v171 = vmul.f32 %v150, %v150
    %v172 = vadd.f32 %v164, %v165
    %173 = vadd.xlane.f32.xlu0 %v172
    %v174 = vpop.xlane.xlu0 %173
    %v175 = vadd.f32 %v166, %v167
    %176 = vadd.xlane.f32.xlu0 %v175
    %v177 = vpop.xlane.xlu0 %176
    %v178 = vadd.f32 %v168, %v169
    %179 = vadd.xlane.f32.xlu0 %v178
    %v180 = vpop.xlane.xlu0 %179
    %v181 = vadd.f32 %v170, %v171
    %182 = vadd.xlane.f32.xlu0 %v181
    %v183 = vpop.xlane.xlu0 %182
    %v184 = vmul.f32 %v154, 0.00390625
    %v185 = vmul.f32 %v157, 0.00390625
    %v186 = vmul.f32 %v160, 0.00390625
    %v187 = vmul.f32 %v163, 0.00390625
    %v188 = vmul.f32 %v174, 0.00390625
    %v189 = vmul.f32 %v177, 0.00390625
    %v190 = vmul.f32 %v180, 0.00390625
    %v191 = vmul.f32 %v183, 0.00390625
    %v192 = vmul.f32 %v184, %v184
    %v193 = vmul.f32 %v185, %v185
    %v194 = vmul.f32 %v186, %v186
    %v195 = vmul.f32 %v187, %v187
    %v196 = vsub.f32 %v188, %v192
    %v197 = vsub.f32 %v189, %v193
    %v198 = vsub.f32 %v190, %v194
    %v199 = vsub.f32 %v191, %v195
    %v200 = vadd.f32 %v196, 1e-05
    %v201 = vadd.f32 %v197, 1e-05
    %v202 = vadd.f32 %v198, 1e-05
    %v203 = vadd.f32 %v199, 1e-05
    %v204 = vrsqrt.pop %v200
    %v205 = vmul.f32 %v204, %v200
    %v206 = vmul.f32 %v205, %v204
    %v207 = vmul.f32 0.5, %v206
    %v208 = vsub.f32 1.5, %v207
    %v209 = vmul.f32 %v204, %v208
    %vm210 = vweird.f32 %v200
    %vm211 = vweird.f32 %v204
    %vm212 = vmor %vm210, %vm211
    %v213 = vsel %vm212, %v204, %v209
    %v214 = vrsqrt.pop %v201
    %v215 = vmul.f32 %v214, %v201
    %v216 = vmul.f32 %v215, %v214
    %v217 = vmul.f32 0.5, %v216
    %v218 = vsub.f32 1.5, %v217
    %v219 = vmul.f32 %v214, %v218
    %vm220 = vweird.f32 %v201
    %vm221 = vweird.f32 %v214
    %vm222 = vmor %vm220, %vm221
    %v223 = vsel %vm222, %v214, %v219
    %v224 = vrsqrt.pop %v202
    %v225 = vmul.f32 %v224, %v202
    %v226 = vmul.f32 %v225, %v224
    %v227 = vmul.f32 0.5, %v226
    %v228 = vsub.f32 1.5, %v227
    %v229 = vmul.f32 %v224, %v228
    %vm230 = vweird.f32 %v202
    %vm231 = vweird.f32 %v224
    %vm232 = vmor %vm230, %vm231
    %v233 = vsel %vm232, %v224, %v229
    %v234 = vrsqrt.pop %v203
    %v235 = vmul.f32 %v234, %v203
    %v236 = vmul.f32 %v235, %v234
    %v237 = vmul.f32 0.5, %v236
    %v238 = vsub.f32 1.5, %v237
    %v239 = vmul.f32 %v234, %v238
    %vm240 = vweird.f32 %v203
    %vm241 = vweird.f32 %v234
    %vm242 = vmor %vm240, %vm241
    %v243 = vsel %vm242, %v234, %v239
    %v244 = vmul.f32 %v45, %v213
    %v245 = vmul.f32 %v46, %v223
    %v246 = vmul.f32 %v47, %v233
    %v247 = vmul.f32 %v48, %v243
    %v248 = vmul.f32 %v184, %v244
    %v249 = vmul.f32 %v185, %v245
    %v250 = vmul.f32 %v186, %v246
    %v251 = vmul.f32 %v187, %v247
    %v252 = vsub.f32 %v53, %v248
    %v253 = vsub.f32 %v54, %v249
    %v254 = vsub.f32 %v55, %v250
    %v255 = vsub.f32 %v56, %v251
    %257 = vset.pattern.permute.xlu0 0
    %258 = vperm.xlu0 %257, %v244
    %v259 = vpop.permute.xlu0 %258
    %262 = vset.pattern.permute.xlu0 0
    %263 = vperm.xlu0 %262, %v245
    %v264 = vpop.permute.xlu0 %263
    %267 = vset.pattern.permute.xlu0 0
    %268 = vperm.xlu0 %267, %v246
    %v269 = vpop.permute.xlu0 %268
    %272 = vset.pattern.permute.xlu0 0
    %273 = vperm.xlu0 %272, %v247
    %v274 = vpop.permute.xlu0 %273
    %v276 = vmul.f32 %v112, %v259
    %v277 = vmul.f32 %v141, %v259
    %v278 = vmul.f32 %v115, %v264
    %v279 = vmul.f32 %v144, %v264
    %v280 = vmul.f32 %v118, %v269
    %v281 = vmul.f32 %v147, %v269
    %v282 = vmul.f32 %v121, %v274
    %v283 = vmul.f32 %v150, %v274
    %285 = vset.pattern.permute.xlu0 0
    %286 = vperm.xlu0 %285, %v252
    %v287 = vpop.permute.xlu0 %286
    %290 = vset.pattern.permute.xlu0 0
    %291 = vperm.xlu0 %290, %v253
    %v292 = vpop.permute.xlu0 %291
    %295 = vset.pattern.permute.xlu0 0
    %296 = vperm.xlu0 %295, %v254
    %v297 = vpop.permute.xlu0 %296
    %300 = vset.pattern.permute.xlu0 0
    %301 = vperm.xlu0 %300, %v255
    %v302 = vpop.permute.xlu0 %301
    %v304 = vadd.f32 %v276, %v287
    %v305 = vadd.f32 %v277, %v287
    %v306 = vadd.f32 %v278, %v292
    %v307 = vadd.f32 %v279, %v292
    %v308 = vadd.f32 %v280, %v297
    %v309 = vadd.f32 %v281, %v297
    %v310 = vadd.f32 %v282, %v302
    %v311 = vadd.f32 %v283, %v302
    %v312 = vmax.f32 %v304, 0.0
    %v313 = vmax.f32 %v305, 0.0
    %v314 = vmax.f32 %v306, 0.0
    %v315 = vmax.f32 %v307, 0.0
    %v316 = vmax.f32 %v308, 0.0
    %v317 = vmax.f32 %v309, 0.0
    %v318 = vmax.f32 %v310, 0.0
    %v319 = vmax.f32 %v311, 0.0
    %321 = vset.pattern.permute.xlu0 0
    %322 = vperm.xlu0 %321, %v41
    %v323 = vpop.permute.xlu0 %322
    %326 = vset.pattern.permute.xlu0 0
    %327 = vperm.xlu0 %326, %v42
    %v328 = vpop.permute.xlu0 %327
    %331 = vset.pattern.permute.xlu0 0
    %332 = vperm.xlu0 %331, %v43
    %v333 = vpop.permute.xlu0 %332
    %336 = vset.pattern.permute.xlu0 0
    %337 = vperm.xlu0 %336, %v44
    %v338 = vpop.permute.xlu0 %337
    %v341 = vsel %vm81, %v33, 0
    %v344 = vsel %vm81, %v34, 0
    %v347 = vsel %vm81, %v35, 0
    %v350 = vsel %vm81, %v36, 0
    %352 = vmatpush.msra.mxu0 0.0
    %353 = vmatpush.msra.mxu0 0.0
    %354 = vmatpush.msra.mxu0 0.0
    %355 = vmatpush.msra.mxu0 0.0
    %356 = vmatpush.msra.mxu0 0.0
    %357 = vmatpush.msra.mxu0 0.0
    %358 = vmatpush.msra.mxu0 0.0
    %359 = vmatpush.msra.mxu0 0.0
    %360 = vmatpush.msra.mxu0 0.0
    %361 = vmatpush.msra.mxu0 0.0
    %362 = vmatpush.msra.mxu0 0.0
    %363 = vmatpush.msra.mxu0 0.0
    %364 = vmatpush.msra.mxu0 %v318
    %365 = vmatpush.msra.mxu0 %v316
    %366 = vmatpush.msra.mxu0 %v314
    %367 = vmatpush.msra.mxu0 %v312
    %368 = vmatmul.f32.gmra.mxu0 %v341
    %v369 = vpop.f32.mrf.mxu0
    %v370 = vadd.f32 %v323, %v369
    %371 = vmatmul.f32.gmra.mxu0 %v344
    %v372 = vpop.f32.mrf.mxu0
    %v373 = vadd.f32 %v328, %v372
    %374 = vmatmul.f32.gmra.mxu0 %v347
    %v375 = vpop.f32.mrf.mxu0
    %v376 = vadd.f32 %v333, %v375
    %377 = vmatmul.f32.gmra.mxu0 %v350
    %v378 = vpop.f32.mrf.mxu0
    %v379 = vadd.f32 %v338, %v378
    %380 = vdwg.mxu0
    %381 = vmatpush.msra.mxu0 0.0
    %382 = vmatpush.msra.mxu0 0.0
    %383 = vmatpush.msra.mxu0 0.0
    %384 = vmatpush.msra.mxu0 0.0
    %385 = vmatpush.msra.mxu0 0.0
    %386 = vmatpush.msra.mxu0 0.0
    %387 = vmatpush.msra.mxu0 0.0
    %388 = vmatpush.msra.mxu0 0.0
    %389 = vmatpush.msra.mxu0 0.0
    %390 = vmatpush.msra.mxu0 0.0
    %391 = vmatpush.msra.mxu0 0.0
    %392 = vmatpush.msra.mxu0 0.0
    %393 = vmatpush.msra.mxu0 %v319
    %394 = vmatpush.msra.mxu0 %v317
    %395 = vmatpush.msra.mxu0 %v315
    %396 = vmatpush.msra.mxu0 %v313
    %397 = vmatmul.f32.gmra.mxu0 %v341
    %v398 = vpop.f32.mrf.mxu0
    %v399 = vadd.f32 %v323, %v398
    %400 = vmatmul.f32.gmra.mxu0 %v344
    %v401 = vpop.f32.mrf.mxu0
    %v402 = vadd.f32 %v328, %v401
    %403 = vmatmul.f32.gmra.mxu0 %v347
    %v404 = vpop.f32.mrf.mxu0
    %v405 = vadd.f32 %v333, %v404
    %406 = vmatmul.f32.gmra.mxu0 %v350
    %v407 = vpop.f32.mrf.mxu0
    %v408 = vadd.f32 %v338, %v407
    %409 = vdwg.mxu0
    %v410 = vadd.f32 %v370, %v399
    %411 = vadd.xlane.f32.xlu0 %v410
    %v412 = vpop.xlane.xlu0 %411
    %v413 = vadd.f32 %v373, %v402
    %414 = vadd.xlane.f32.xlu0 %v413
    %v415 = vpop.xlane.xlu0 %414
    %v416 = vadd.f32 %v376, %v405
    %417 = vadd.xlane.f32.xlu0 %v416
    %v418 = vpop.xlane.xlu0 %417
    %v419 = vadd.f32 %v379, %v408
    %420 = vadd.xlane.f32.xlu0 %v419
    %v421 = vpop.xlane.xlu0 %420
    %v422 = vmul.f32 %v370, %v370
    %v423 = vmul.f32 %v399, %v399
    %v424 = vmul.f32 %v373, %v373
    %v425 = vmul.f32 %v402, %v402
    %v426 = vmul.f32 %v376, %v376
    %v427 = vmul.f32 %v405, %v405
    %v428 = vmul.f32 %v379, %v379
    %v429 = vmul.f32 %v408, %v408
    %v430 = vadd.f32 %v422, %v423
    %431 = vadd.xlane.f32.xlu0 %v430
    %v432 = vpop.xlane.xlu0 %431
    %v433 = vadd.f32 %v424, %v425
    %434 = vadd.xlane.f32.xlu0 %v433
    %v435 = vpop.xlane.xlu0 %434
    %v436 = vadd.f32 %v426, %v427
    %437 = vadd.xlane.f32.xlu0 %v436
    %v438 = vpop.xlane.xlu0 %437
    %v439 = vadd.f32 %v428, %v429
    %440 = vadd.xlane.f32.xlu0 %v439
    %v441 = vpop.xlane.xlu0 %440
    %v442 = vmul.f32 %v412, 0.00390625
    %v443 = vmul.f32 %v415, 0.00390625
    %v444 = vmul.f32 %v418, 0.00390625
    %v445 = vmul.f32 %v421, 0.00390625
    %v446 = vmul.f32 %v432, 0.00390625
    %v447 = vmul.f32 %v435, 0.00390625
    %v448 = vmul.f32 %v438, 0.00390625
    %v449 = vmul.f32 %v441, 0.00390625
    %v450 = vmul.f32 %v442, %v442
    %v451 = vmul.f32 %v443, %v443
    %v452 = vmul.f32 %v444, %v444
    %v453 = vmul.f32 %v445, %v445
    %v454 = vsub.f32 %v446, %v450
    %v455 = vsub.f32 %v447, %v451
    %v456 = vsub.f32 %v448, %v452
    %v457 = vsub.f32 %v449, %v453
    %v458 = vadd.f32 %v454, 1e-05
    %v459 = vadd.f32 %v455, 1e-05
    %v460 = vadd.f32 %v456, 1e-05
    %v461 = vadd.f32 %v457, 1e-05
    %v462 = vrsqrt.pop %v458
    %v463 = vmul.f32 %v462, %v458
    %v464 = vmul.f32 %v463, %v462
    %v465 = vmul.f32 0.5, %v464
    %v466 = vsub.f32 1.5, %v465
    %v467 = vmul.f32 %v462, %v466
    %vm468 = vweird.f32 %v458
    %vm469 = vweird.f32 %v462
    %vm470 = vmor %vm468, %vm469
    %v471 = vsel %vm470, %v462, %v467
    %v472 = vrsqrt.pop %v459
    %v473 = vmul.f32 %v472, %v459
    %v474 = vmul.f32 %v473, %v472
    %v475 = vmul.f32 0.5, %v474
    %v476 = vsub.f32 1.5, %v475
    %v477 = vmul.f32 %v472, %v476
    %vm478 = vweird.f32 %v459
    %vm479 = vweird.f32 %v472
    %vm480 = vmor %vm478, %vm479
    %v481 = vsel %vm480, %v472, %v477
    %v482 = vrsqrt.pop %v460
    %v483 = vmul.f32 %v482, %v460
    %v484 = vmul.f32 %v483, %v482
    %v485 = vmul.f32 0.5, %v484
    %v486 = vsub.f32 1.5, %v485
    %v487 = vmul.f32 %v482, %v486
    %vm488 = vweird.f32 %v460
    %vm489 = vweird.f32 %v482
    %vm490 = vmor %vm488, %vm489
    %v491 = vsel %vm490, %v482, %v487
    %v492 = vrsqrt.pop %v461
    %v493 = vmul.f32 %v492, %v461
    %v494 = vmul.f32 %v493, %v492
    %v495 = vmul.f32 0.5, %v494
    %v496 = vsub.f32 1.5, %v495
    %v497 = vmul.f32 %v492, %v496
    %vm498 = vweird.f32 %v461
    %vm499 = vweird.f32 %v492
    %vm500 = vmor %vm498, %vm499
    %v501 = vsel %vm500, %v492, %v497
    %v502 = vmul.f32 %v49, %v471
    %v503 = vmul.f32 %v50, %v481
    %v504 = vmul.f32 %v51, %v491
    %v505 = vmul.f32 %v52, %v501
    %v506 = vmul.f32 %v442, %v502
    %v507 = vmul.f32 %v443, %v503
    %v508 = vmul.f32 %v444, %v504
    %v509 = vmul.f32 %v445, %v505
    %v510 = vsub.f32 %v57, %v506
    %v511 = vsub.f32 %v58, %v507
    %v512 = vsub.f32 %v59, %v508
    %v513 = vsub.f32 %v60, %v509
    %515 = vset.pattern.permute.xlu0 0
    %516 = vperm.xlu0 %515, %v502
    %v517 = vpop.permute.xlu0 %516
    %520 = vset.pattern.permute.xlu0 0
    %521 = vperm.xlu0 %520, %v503
    %v522 = vpop.permute.xlu0 %521
    %525 = vset.pattern.permute.xlu0 0
    %526 = vperm.xlu0 %525, %v504
    %v527 = vpop.permute.xlu0 %526
    %530 = vset.pattern.permute.xlu0 0
    %531 = vperm.xlu0 %530, %v505
    %v532 = vpop.permute.xlu0 %531
    %v534 = vmul.f32 %v370, %v517
    %v535 = vmul.f32 %v399, %v517
    %v536 = vmul.f32 %v373, %v522
    %v537 = vmul.f32 %v402, %v522
    %v538 = vmul.f32 %v376, %v527
    %v539 = vmul.f32 %v405, %v527
    %v540 = vmul.f32 %v379, %v532
    %v541 = vmul.f32 %v408, %v532
    %543 = vset.pattern.permute.xlu0 0
    %544 = vperm.xlu0 %543, %v510
    %v545 = vpop.permute.xlu0 %544
    %548 = vset.pattern.permute.xlu0 0
    %549 = vperm.xlu0 %548, %v511
    %v550 = vpop.permute.xlu0 %549
    %553 = vset.pattern.permute.xlu0 0
    %554 = vperm.xlu0 %553, %v512
    %v555 = vpop.permute.xlu0 %554
    %558 = vset.pattern.permute.xlu0 0
    %559 = vperm.xlu0 %558, %v513
    %v560 = vpop.permute.xlu0 %559
    %v562 = vadd.f32 %v534, %v545
    %v563 = vadd.f32 %v535, %v545
    %v564 = vadd.f32 %v536, %v550
    %v565 = vadd.f32 %v537, %v550
    %v566 = vadd.f32 %v538, %v555
    %v567 = vadd.f32 %v539, %v555
    %v568 = vadd.f32 %v540, %v560
    %v569 = vadd.f32 %v541, %v560
    %v570 = vmax.f32 %v562, 0.0
    %v571 = vmax.f32 %v563, 0.0
    %v572 = vmax.f32 %v564, 0.0
    %v573 = vmax.f32 %v565, 0.0
    %v574 = vmax.f32 %v566, 0.0
    %v575 = vmax.f32 %v567, 0.0
    %v576 = vmax.f32 %v568, 0.0
    %v577 = vmax.f32 %v569, 0.0
    %v578 = vmul.f32 %v570, 0.5
    %v579 = vmul.f32 %v571, 0.5
    %v580 = vmul.f32 %v572, 0.5
    %v581 = vmul.f32 %v573, 0.5
    %v582 = vmul.f32 %v574, 0.5
    %v583 = vmul.f32 %v575, 0.5
    %v584 = vmul.f32 %v576, 0.5
    %v585 = vmul.f32 %v577, 0.5
    %v586 = vadd.f32 %v21, %v578
    %v587 = vadd.f32 %v22, %v579
    %v588 = vadd.f32 %v23, %v580
    %v589 = vadd.f32 %v24, %v581
    %v590 = vadd.f32 %v25, %v582
    %v591 = vadd.f32 %v26, %v583
    %v592 = vadd.f32 %v27, %v584
    %v593 = vadd.f32 %v28, %v585
    %594 = vst [vmem:[#allocation2] sm:$0xff] %v586
    %595 = vst [vmem:[#allocation2 + $0x8] sm:$0xff] %v587
    %596 = vst [vmem:[#allocation2 + $0x10] sm:$0xff] %v588
    %597 = vst [vmem:[#allocation2 + $0x18] sm:$0xff] %v589
    %598 = vst [vmem:[#allocation2 + $0x20] sm:$0xff] %v590
    %599 = vst [vmem:[#allocation2 + $0x28] sm:$0xff] %v591
    %600 = vst [vmem:[#allocation2 + $0x30] sm:$0xff] %v592
    %601 = vst [vmem:[#allocation2 + $0x38] sm:$0xff] %v593
    // Predicated region
    $region22: #{tpu_custom_call.1} parent=1 // pred_check
      _
    $region23: #{tpu_custom_call.1} parent=1 // pred_check_branch
      %603 = sbr.rel (0) target = $region25
    $region24: #{tpu_custom_call.1} parent=1 // pred_region
      %605 = vsyncadd [#allocation3], 0
      %s606 = sshll.u32 [#allocation2], 4
      %s607 = int_to_ptr.vmem [resolvable:$true] %s606
      %s608 = sshll.u32 %s5, 4
      %s609 = int_to_ptr.hbm [resolvable:$true] %s608
      %614 = dma.vmem_to_hbm [thread:$0]  %s607, 1024, %s609, [#allocation3], 256, 256, 16
    $region25: #{tpu_custom_call.1} parent=1 // pred_fallthru
      _
    // Predicated region
    $region26: #{tpu_custom_call.1} parent=1 // pred_check
      _
    $region27: #{tpu_custom_call.1} parent=1 // pred_check_branch
      %616 = sbr.rel (0) target = $region29
    $region28: #{tpu_custom_call.1} parent=1 // pred_region
      %618 = dma.done [#allocation3], 1024
    $region29: #{tpu_custom_call.1} parent=1 // pred_fallthru
      _
    %619 = vsyncpa [#allocation3], 1

</llo_original>
